<compile_context>
chip_gen: v7x
topology: tpu7x:2x2x1
jax: 0.10.0
libtpu: 0.0.40
codegen_flags: <defaults>
</compile_context>

<pallas_src>
import jax
import jax.numpy as jnp
from jax.experimental import pallas as pl
from jax.experimental.pallas import tpu as pltpu


# ----------------------------------------------------------------------------
# Pass 1: per-batch partial statistics of x.
#   xsum[n] = sum_p x[n, :, p]            -> (Cin, 1)
#   gram[n] = sum_p x[n, :, p] x[n, :, p]^T -> (Cin, Cin)
# ----------------------------------------------------------------------------
def _stats_kernel(x_ref, gram_ref, xsum_ref):
    j = pl.program_id(1)

    @pl.when(j == 0)
    def _():
        gram_ref[...] = jnp.zeros_like(gram_ref)
        xsum_ref[...] = jnp.zeros_like(xsum_ref)

    x = x_ref[...]                                          # (Cin, tile_hw)
    gram_ref[...] += jnp.dot(x, x.T, preferred_element_type=jnp.float32)
    xsum_ref[...] += jnp.sum(x, axis=1, keepdims=True)


# ----------------------------------------------------------------------------
# Pass 2: BN-folded fused 1x1 conv:  out = W_eff @ x + b_eff
# ----------------------------------------------------------------------------
def _apply_kernel(x_ref, w_ref, b_ref, o_ref):
    o_ref[...] = (
        jnp.dot(w_ref[...], x_ref[...], preferred_element_type=jnp.float32)
        + b_ref[...]
    ).astype(o_ref.dtype)


def _pick_tile_hw(hw, target=2048):
    """Largest pixel tile <= target that divides hw and is lane-aligned."""
    if hw <= target:
        return hw
    best = None
    t = 128
    while t <= target:
        if hw % t == 0:
            best = t
        t += 128
    return best if best is not None else hw


@jax.jit
def att_fire_module(x_nchw, w_fire, gamma, beta, w_left, w_right, *, eps=1e-5):
    N, Cin, H, W = x_nchw.shape
    squeeze = w_fire.shape[0]
    filters = w_left.shape[0]
    Cout = 2 * filters
    HW = H * W
    P = N * HW
    tile_hw = _pick_tile_hw(HW)
    n_tiles = HW // tile_hw

    # glue: NCHW -> (N, Cin, HW) is a contiguous (free) reshape.
    x = x_nchw.reshape(N, Cin, HW).astype(jnp.float32)

    # ---- pass 1: per-batch partial sum(x) and Gram(x) ------------------------
    gram_p, xsum_p = pl.pallas_call(
        _stats_kernel,
        out_shape=(
            jax.ShapeDtypeStruct((N, Cin, Cin), jnp.float32),
            jax.ShapeDtypeStruct((N, Cin, 1), jnp.float32),
        ),
        grid_spec=pltpu.PrefetchScalarGridSpec(
            num_scalar_prefetch=0,
            grid=(N, n_tiles),
            in_specs=[
                pl.BlockSpec((None, Cin, tile_hw), lambda n, j: (n, 0, j)),
            ],
            out_specs=[
                pl.BlockSpec((None, Cin, Cin), lambda n, j: (n, 0, 0)),
                pl.BlockSpec((None, Cin, 1), lambda n, j: (n, 0, 0)),
            ],
        ),
        compiler_params=pltpu.CompilerParams(
            dimension_semantics=("parallel", "arbitrary")),
    )(x)

    # glue: finish the tiny reductions and fold BN into the expand weights.
    gram = jnp.sum(gram_p, axis=0)                       # (Cin, Cin)
    xsum = jnp.sum(xsum_p, axis=0)[:, 0]                 # (Cin,)

    sum_s = w_fire @ xsum                                # (squeeze,)
    ssq_s = jnp.sum((w_fire @ gram) * w_fire, axis=1)    # (squeeze,)
    mean = sum_s / P
    # TODO(synk): E[s^2]-E[s]^2 in fp32 can cancel for strongly non-zero-mean
    # inputs; a shifted two-pass variance would be safer in that regime.
    var = ssq_s / P - mean * mean                        # biased (training BN)
    scale = gamma * jax.lax.rsqrt(var + eps)             # (squeeze,)
    shift = beta - mean * scale                          # (squeeze,)

    w_cat = jnp.concatenate([w_left, w_right], axis=0)   # (Cout, squeeze)
    w_eff = ((w_cat * scale[None, :]) @ w_fire).astype(jnp.float32)  # (Cout, Cin)
    b_eff = (w_cat @ shift).reshape(Cout, 1).astype(jnp.float32)     # (Cout, 1)

    # ---- pass 2: out = W_eff @ x + b_eff  (lane-dense output tiles) ----------
    out = pl.pallas_call(
        _apply_kernel,
        out_shape=jax.ShapeDtypeStruct((N, Cout, HW), jnp.float32),
        grid_spec=pltpu.PrefetchScalarGridSpec(
            num_scalar_prefetch=0,
            grid=(N, n_tiles),
            in_specs=[
                pl.BlockSpec((None, Cin, tile_hw), lambda n, j: (n, 0, j)),
                pl.BlockSpec((Cout, Cin), lambda n, j: (0, 0)),
                pl.BlockSpec((Cout, 1), lambda n, j: (0, 0)),
            ],
            out_specs=pl.BlockSpec((None, Cout, tile_hw), lambda n, j: (n, 0, j)),
        ),
        compiler_params=pltpu.CompilerParams(
            dimension_semantics=("parallel", "parallel")),
    )(x, w_eff, b_eff)

    # glue: (N, Cout, HW) -> NCHW is a free reshape.
    return out.reshape(N, Cout, H, W)


def _reference(x_nchw, w_fire, gamma, beta, w_left, w_right, eps=1e-5):
    """Pure-JAX reference mirroring the PyTorch forward (training-mode BN)."""
    x = jnp.transpose(x_nchw, (0, 2, 3, 1))                       # NHWC
    s = jnp.einsum("nhwc,sc->nhws", x, w_fire)
    mean = jnp.mean(s, axis=(0, 1, 2))
    var = jnp.mean((s - mean) ** 2, axis=(0, 1, 2))               # biased
    y = (s - mean) * jax.lax.rsqrt(var + eps) * gamma + beta
    left = jnp.einsum("nhws,fs->nhwf", y, w_left)
    right = jnp.einsum("nhws,fs->nhwf", y, w_right)
    out = jnp.concatenate([left, right], axis=-1)
    return jnp.transpose(out, (0, 3, 1, 2))                       # NCHW


if __name__ == "__main__":
    # Small shapes consistent with the module: in_channels=4, squeeze=8,
    # filters=16, batch=2, spatial=16x16.
    N, Cin, H, W = 2, 4, 16, 16
    squeeze, filters = 8, 16

    key = jax.random.PRNGKey(0)
    k_x, k_f, k_g, k_b, k_l, k_r = jax.random.split(key, 6)

    x = jax.random.normal(k_x, (N, Cin, H, W), dtype=jnp.float32)
    # Conv2d(..., (1,1), bias=False) weights are (out, in, 1, 1) -> use (out, in).
    w_fire = jax.random.normal(k_f, (squeeze, Cin), dtype=jnp.float32) * 0.5
    gamma = 1.0 + 0.1 * jax.random.normal(k_g, (squeeze,), dtype=jnp.float32)
    beta = 0.1 * jax.random.normal(k_b, (squeeze,), dtype=jnp.float32)
    w_left = jax.random.normal(k_l, (filters, squeeze), dtype=jnp.float32) * 0.5
    w_right = jax.random.normal(k_r, (filters, squeeze), dtype=jnp.float32) * 0.5

    out = att_fire_module(x, w_fire, gamma, beta, w_left, w_right)
    out = jax.block_until_ready(out)

    ref = _reference(x, w_fire, gamma, beta, w_left, w_right)
    assert out.shape == (N, 2 * filters, H, W), out.shape
    assert jnp.allclose(out, ref, atol=1e-4, rtol=1e-4), \
        float(jnp.max(jnp.abs(out - ref)))

    print("KERNEL_OK")
</pallas_src>

<mosaic_0001>
module attributes {stable_mosaic.version = 11 : i64} {
  func.func @_stats_kernel(%arg0: i32, %arg1: i32, %arg2: memref<1x4x256xf32, #tpu.memory_space<vmem>>, %arg3: memref<1x4x4xf32, #tpu.memory_space<vmem>>, %arg4: memref<1x4x1xf32, #tpu.memory_space<vmem>>) attributes {dimension_semantics = [#tpu.dimension_semantics<parallel>, #tpu.dimension_semantics<arbitrary>], iteration_bounds = array<i64: 2, 1>, scalar_prefetch = 0 : i64, scratch_operands = 0 : i64, tpu.core_type = #tpu.core_type<tc>, window_params = [{transform_indices = @transform_0, window_bounds = array<i64: 1, 4, 256>}, {transform_indices = @transform_1, window_bounds = array<i64: 1, 4, 4>}, {transform_indices = @transform_2, window_bounds = array<i64: 1, 4, 1>}]} {
    %c0_i32 = arith.constant 0 : i32
    %0 = arith.cmpi eq, %arg1, %c0_i32 : i32
    %1 = arith.extui %0 : i1 to i32
    %c0_i32_0 = arith.constant 0 : i32
    %2 = arith.cmpi ne, %1, %c0_i32_0 : i32
    scf.if %2 {
      %cst_16 = arith.constant 0.000000e+00 : f32
      %21 = vector.broadcast %cst_16 : f32 to vector<4x4xf32>
      %c0_17 = arith.constant 0 : index
      %c0_18 = arith.constant 0 : index
      %c0_19 = arith.constant 0 : index
      %22 = vector.load %arg3[%c0_17, %c0_18, %c0_19] : memref<1x4x4xf32, #tpu.memory_space<vmem>>, vector<1x4x4xf32>
      %23 = vector.shape_cast %22 : vector<1x4x4xf32> to vector<4x4xf32>
      %24 = vector.shape_cast %21 : vector<4x4xf32> to vector<1x4x4xf32>
      tpu.vector_store %arg3[%c0_17, %c0_18, %c0_19], %24 {strides = array<i32>} : memref<1x4x4xf32, #tpu.memory_space<vmem>>, vector<1x4x4xf32>,
      %cst_20 = arith.constant 0.000000e+00 : f32
      %25 = vector.broadcast %cst_20 : f32 to vector<4x1xf32>
      %c0_21 = arith.constant 0 : index
      %c0_22 = arith.constant 0 : index
      %c0_23 = arith.constant 0 : index
      %26 = vector.load %arg4[%c0_21, %c0_22, %c0_23] : memref<1x4x1xf32, #tpu.memory_space<vmem>>, vector<1x4x1xf32>
      %27 = vector.shape_cast %26 : vector<1x4x1xf32> to vector<4x1xf32>
      %28 = vector.shape_cast %25 : vector<4x1xf32> to vector<1x4x1xf32>
      tpu.vector_store %arg4[%c0_21, %c0_22, %c0_23], %28 {strides = array<i32>} : memref<1x4x1xf32, #tpu.memory_space<vmem>>, vector<1x4x1xf32>,
    } else {
    }
    %c0 = arith.constant 0 : index
    %c0_1 = arith.constant 0 : index
    %c0_2 = arith.constant 0 : index
    %3 = vector.load %arg2[%c0, %c0_1, %c0_2] : memref<1x4x256xf32, #tpu.memory_space<vmem>>, vector<1x4x256xf32>
    %4 = vector.shape_cast %3 : vector<1x4x256xf32> to vector<4x256xf32>
    %c0_3 = arith.constant 0 : index
    %c0_4 = arith.constant 0 : index
    %c0_5 = arith.constant 0 : index
    %5 = vector.load %arg3[%c0_3, %c0_4, %c0_5] : memref<1x4x4xf32, #tpu.memory_space<vmem>>, vector<1x4x4xf32>
    %6 = vector.shape_cast %5 : vector<1x4x4xf32> to vector<4x4xf32>
    %7 = tpu.transpose %4, [1, 0] : vector<4x256xf32> -> vector<256x4xf32>
    %cst = arith.constant dense<0.000000e+00> : vector<4x4xf32>
    %8 = tpu.matmul %4, %7, %cst {dimension_numbers = #tpu.dot_dimension_numbers<[1], [0], [0], [1], [0, 0, 1, 1], [], []>} : vector<4x256xf32>, vector<256x4xf32>, vector<4x4xf32> -> vector<4x4xf32>
    %9 = arith.addf %6, %8 : vector<4x4xf32>
    %c0_6 = arith.constant 0 : index
    %c0_7 = arith.constant 0 : index
    %c0_8 = arith.constant 0 : index
    %10 = vector.load %arg3[%c0_6, %c0_7, %c0_8] : memref<1x4x4xf32, #tpu.memory_space<vmem>>, vector<1x4x4xf32>
    %11 = vector.shape_cast %10 : vector<1x4x4xf32> to vector<4x4xf32>
    %12 = vector.shape_cast %9 : vector<4x4xf32> to vector<1x4x4xf32>
    tpu.vector_store %arg3[%c0_6, %c0_7, %c0_8], %12 {strides = array<i32>} : memref<1x4x4xf32, #tpu.memory_space<vmem>>, vector<1x4x4xf32>,
    %c0_9 = arith.constant 0 : index
    %c0_10 = arith.constant 0 : index
    %c0_11 = arith.constant 0 : index
    %13 = vector.load %arg4[%c0_9, %c0_10, %c0_11] : memref<1x4x1xf32, #tpu.memory_space<vmem>>, vector<1x4x1xf32>
    %14 = vector.shape_cast %13 : vector<1x4x1xf32> to vector<4x1xf32>
    %cst_12 = arith.constant dense<0.000000e+00> : vector<4xf32>
    %15 = vector.multi_reduction <add>, %4, %cst_12 [1] : vector<4x256xf32> to vector<4xf32>
    %16 = vector.shape_cast %15 : vector<4xf32> to vector<4x1xf32>
    %17 = arith.addf %14, %16 : vector<4x1xf32>
    %c0_13 = arith.constant 0 : index
    %c0_14 = arith.constant 0 : index
    %c0_15 = arith.constant 0 : index
    %18 = vector.load %arg4[%c0_13, %c0_14, %c0_15] : memref<1x4x1xf32, #tpu.memory_space<vmem>>, vector<1x4x1xf32>
    %19 = vector.shape_cast %18 : vector<1x4x1xf32> to vector<4x1xf32>
    %20 = vector.shape_cast %17 : vector<4x1xf32> to vector<1x4x1xf32>
    tpu.vector_store %arg4[%c0_13, %c0_14, %c0_15], %20 {strides = array<i32>} : memref<1x4x1xf32, #tpu.memory_space<vmem>>, vector<1x4x1xf32>,
    return
  }
  func.func @transform_0(%arg0: i32, %arg1: i32) -> (i32, i32, i32) {
    %c0_i32 = arith.constant 0 : i32
    %c0_i32_0 = arith.constant 0 : i32
    return %arg0, %c0_i32, %arg1 : i32, i32, i32
  }
  func.func @transform_1(%arg0: i32, %arg1: i32) -> (i32, i32, i32) {
    %c0_i32 = arith.constant 0 : i32
    %c0_i32_0 = arith.constant 0 : i32
    %c0_i32_1 = arith.constant 0 : i32
    return %arg0, %c0_i32, %c0_i32_0 : i32, i32, i32
  }
  func.func @transform_2(%arg0: i32, %arg1: i32) -> (i32, i32, i32) {
    %c0_i32 = arith.constant 0 : i32
    %c0_i32_0 = arith.constant 0 : i32
    %c0_i32_1 = arith.constant 0 : i32
    return %arg0, %c0_i32, %c0_i32_0 : i32, i32, i32
  }
}

module attributes {stable_mosaic.version = 11 : i64} {
  func.func @_apply_kernel(%arg0: i32, %arg1: i32, %arg2: memref<1x4x256xf32, #tpu.memory_space<vmem>>, %arg3: memref<32x4xf32, #tpu.memory_space<vmem>>, %arg4: memref<32x1xf32, #tpu.memory_space<vmem>>, %arg5: memref<1x32x256xf32, #tpu.memory_space<vmem>>) attributes {dimension_semantics = [#tpu.dimension_semantics<parallel>, #tpu.dimension_semantics<parallel>], iteration_bounds = array<i64: 2, 1>, scalar_prefetch = 0 : i64, scratch_operands = 0 : i64, tpu.core_type = #tpu.core_type<tc>, window_params = [{transform_indices = @transform_0, window_bounds = array<i64: 1, 4, 256>}, {pipeline_mode = #tpu.pipeline_mode<synchronous>, transform_indices = @transform_1, window_bounds = array<i64: 32, 4>}, {pipeline_mode = #tpu.pipeline_mode<synchronous>, transform_indices = @transform_2, window_bounds = array<i64: 32, 1>}, {transform_indices = @transform_3, window_bounds = array<i64: 1, 32, 256>}]} {
    %c0 = arith.constant 0 : index
    %c0_0 = arith.constant 0 : index
    %0 = vector.load %arg3[%c0, %c0_0] : memref<32x4xf32, #tpu.memory_space<vmem>>, vector<32x4xf32>
    %c0_1 = arith.constant 0 : index
    %c0_2 = arith.constant 0 : index
    %c0_3 = arith.constant 0 : index
    %1 = vector.load %arg2[%c0_1, %c0_2, %c0_3] : memref<1x4x256xf32, #tpu.memory_space<vmem>>, vector<1x4x256xf32>
    %2 = vector.shape_cast %1 : vector<1x4x256xf32> to vector<4x256xf32>
    %cst = arith.constant dense<0.000000e+00> : vector<32x256xf32>
    %3 = tpu.matmul %0, %2, %cst {dimension_numbers = #tpu.dot_dimension_numbers<[1], [0], [0], [1], [0, 0, 1, 1], [], []>} : vector<32x4xf32>, vector<4x256xf32>, vector<32x256xf32> -> vector<32x256xf32>
    %c0_4 = arith.constant 0 : index
    %c0_5 = arith.constant 0 : index
    %4 = vector.load %arg4[%c0_4, %c0_5] : memref<32x1xf32, #tpu.memory_space<vmem>>, vector<32x1xf32>
    %5 = vector.broadcast %4 : vector<32x1xf32> to vector<32x256xf32>
    %6 = arith.addf %3, %5 : vector<32x256xf32>
    %c0_6 = arith.constant 0 : index
    %c0_7 = arith.constant 0 : index
    %c0_8 = arith.constant 0 : index
    %7 = vector.load %arg5[%c0_6, %c0_7, %c0_8] : memref<1x32x256xf32, #tpu.memory_space<vmem>>, vector<1x32x256xf32>
    %8 = vector.shape_cast %7 : vector<1x32x256xf32> to vector<32x256xf32>
    %9 = vector.shape_cast %6 : vector<32x256xf32> to vector<1x32x256xf32>
    tpu.vector_store %arg5[%c0_6, %c0_7, %c0_8], %9 {strides = array<i32>} : memref<1x32x256xf32, #tpu.memory_space<vmem>>, vector<1x32x256xf32>,
    return
  }
  func.func @transform_0(%arg0: i32, %arg1: i32) -> (i32, i32, i32) {
    %c0_i32 = arith.constant 0 : i32
    %c0_i32_0 = arith.constant 0 : i32
    return %arg0, %c0_i32, %arg1 : i32, i32, i32
  }
  func.func @transform_1(%arg0: i32, %arg1: i32) -> (i32, i32) {
    %c0_i32 = arith.constant 0 : i32
    %c0_i32_0 = arith.constant 0 : i32
    %c0_i32_1 = arith.constant 0 : i32
    return %c0_i32, %c0_i32_0 : i32, i32
  }
  func.func @transform_2(%arg0: i32, %arg1: i32) -> (i32, i32) {
    %c0_i32 = arith.constant 0 : i32
    %c0_i32_0 = arith.constant 0 : i32
    %c0_i32_1 = arith.constant 0 : i32
    return %c0_i32, %c0_i32_0 : i32, i32
  }
  func.func @transform_3(%arg0: i32, %arg1: i32) -> (i32, i32, i32) {
    %c0_i32 = arith.constant 0 : i32
    %c0_i32_0 = arith.constant 0 : i32
    return %arg0, %c0_i32, %arg1 : i32, i32, i32
  }
}

</mosaic_0001>

<llo_original>
// kernel: att_fire_module.3
$region0: #{att_fire_module.3}
  #allocation0 [shape = 'u32[]', space=smem, size = 0x4, offset = 0x4, fixed_abs, tag = 'smem constant byte address 0x4 - core index']
  #allocation1 [shape = 'u32[144,128]{1,0:T(1,128)}', space=vmem, size = 0x12000, scoped, tag = 'internal scratch']
  %s0 = inlined_call_operand.vmem [shape: f32[2,4,256], index: 0, kind: input, shape index: {}]
  %s1 = inlined_call_operand.vmem [shape: f32[32,4], index: 1, kind: input, shape index: {}]
  %s2 = inlined_call_operand.vmem [shape: f32[32,1], index: 2, kind: input, shape index: {}]
  %s3 = inlined_call_operand.vmem [shape: f32[2,32,256], index: 3, kind: output, shape index: {}]
  %s4 = sld [smem:[#allocation0]]
  $region45: #{att_fire_module.3} parent=0
    _
  %s6 = ssub.s32 1, %s4
  %s7 = scalar_select 0, %s6, %s4
  loop: start=0, step=1, limit=4
  $region2: #{att_fire_module.3} parent=0 // loop_pre_header
    _
  $region3: #{att_fire_module.3} parent=0 // loop_header
    %s9 = sphi 0, %s13
    %p10 = scmp.ge.s32.totalorder %s9, 4
    %s16 = sphi 0, %s28
    %s17 = sphi 0, %s24
    %s18 = sphi 0, %s16
    %s19 = sphi 0, %s17
    %s20 = sphi 0, %s18
    %s21 = sphi 0, %s19
    %s33 = sphi 0, %s35
    %s36 = sphi 0, %s33
    %s37 = sphi 0, %s36
    %s53 = sphi 0, %s37
    %s57 = sphi 0, %s57
    %s59 = sphi 0, %s57
    %s60 = sphi 0, %s59
    %s74 = sphi 0, %s60
    %s78 = sphi 0, %s78
    %s80 = sphi 0, %s78
    %s81 = sphi 0, %s80
    %s95 = sphi 0, %s81
    %s103 = sphi 0, %s105
    %s106 = sphi 0, %s103
    %s107 = sphi 0, %s106
    %s123 = sphi 0, %s107
  $region4: #{att_fire_module.3} parent=0 // loop_header_branch
    %12 = sbr.rel (%p10) target = $region8
  $region5: #{att_fire_module.3} parent=0 // loop_body
    %s14 = ssub.s32 %s9, 1
    %s15 = ssub.s32 %s9, 2
    %s22 = sadd.s32 1, %s17
    %p23 = scmp.ge.s32.totalorder %s22, 1
    %s24 = scalar_select %p23, 0, %s22
    %s25 = sadd.s32 1, %s16
    %s26 = scalar_select %p23, %s25, %s16
    %p27 = scmp.ge.s32.totalorder %s26, 2
    %s28 = scalar_select %p27, 0, %s26
    %s29 = ssub.s32 %s16, %s28
    %s30 = ssub.s32 %s17, %s24
    %s31 = sor.u32 %s29, %s30
    %p32 = scmp.eq.s32.totalorder %s31, 0
    %s34 = sadd.s32 %s33, 1
    %s35 = scalar_select %p32, %s33, %s34
    %p38 = pneg %p32
    %p39 = scmp.eq.s32.totalorder %s9, 1
    %p40 = por %p38, %p39
    %p41 = scmp.ne.s32.totalorder %s33, %s36
    %p42 = scmp.eq.s32.totalorder %s9, 0
    %p43 = por %p41, %p42
    %p44 = scmp.ne.s32.totalorder %s33, %s36
    %p45 = scmp.eq.s32.totalorder %s14, 1
    %p46 = por %p44, %p45
    %p47 = scmp.ne.s32.totalorder %s36, %s37
    %p48 = scmp.eq.s32.totalorder %s14, 0
    %p49 = por %p47, %p48
    %p50 = scmp.ne.s32.totalorder %s36, %s37
    %p51 = scmp.eq.s32.totalorder %s15, 1
    %p52 = por %p50, %p51
    %p54 = scmp.ne.s32.totalorder %s37, %s53
    %p55 = scmp.eq.s32.totalorder %s15, 0
    %p56 = por %p54, %p55
    %s58 = sadd.s32 %s57, 1
    %p61 = scmp.eq.s32.totalorder %s9, 1
    %p62 = scmp.ne.s32.totalorder %s57, %s59
    %p63 = scmp.eq.s32.totalorder %s9, 0
    %p64 = por %p62, %p63
    %p65 = scmp.ne.s32.totalorder %s57, %s59
    %p66 = scmp.eq.s32.totalorder %s14, 1
    %p67 = por %p65, %p66
    %p68 = scmp.ne.s32.totalorder %s59, %s60
    %p69 = scmp.eq.s32.totalorder %s14, 0
    %p70 = por %p68, %p69
    %p71 = scmp.ne.s32.totalorder %s59, %s60
    %p72 = scmp.eq.s32.totalorder %s15, 1
    %p73 = por %p71, %p72
    %p75 = scmp.ne.s32.totalorder %s60, %s74
    %p76 = scmp.eq.s32.totalorder %s15, 0
    %p77 = por %p75, %p76
    %s79 = sadd.s32 %s78, 1
    %p82 = scmp.eq.s32.totalorder %s9, 1
    %p83 = scmp.ne.s32.totalorder %s78, %s80
    %p84 = scmp.eq.s32.totalorder %s9, 0
    %p85 = por %p83, %p84
    %p86 = scmp.ne.s32.totalorder %s78, %s80
    %p87 = scmp.eq.s32.totalorder %s14, 1
    %p88 = por %p86, %p87
    %p89 = scmp.ne.s32.totalorder %s80, %s81
    %p90 = scmp.eq.s32.totalorder %s14, 0
    %p91 = por %p89, %p90
    %p92 = scmp.ne.s32.totalorder %s80, %s81
    %p93 = scmp.eq.s32.totalorder %s15, 1
    %p94 = por %p92, %p93
    %p96 = scmp.ne.s32.totalorder %s81, %s95
    %p97 = scmp.eq.s32.totalorder %s15, 0
    %p98 = por %p96, %p97
    %s99 = ssub.s32 %s16, %s28
    %s100 = ssub.s32 %s17, %s24
    %s101 = sor.u32 %s99, %s100
    %p102 = scmp.eq.s32.totalorder %s101, 0
    %s104 = sadd.s32 %s103, 1
    %s105 = scalar_select %p102, %s103, %s104
    %p108 = pneg %p102
    %p109 = scmp.eq.s32.totalorder %s9, 1
    %p110 = por %p108, %p109
    %p111 = scmp.ne.s32.totalorder %s103, %s106
    %p112 = scmp.eq.s32.totalorder %s9, 0
    %p113 = por %p111, %p112
    %p114 = scmp.ne.s32.totalorder %s103, %s106
    %p115 = scmp.eq.s32.totalorder %s14, 1
    %p116 = por %p114, %p115
    %p117 = scmp.ne.s32.totalorder %s106, %s107
    %p118 = scmp.eq.s32.totalorder %s14, 0
    %p119 = por %p117, %p118
    %p120 = scmp.ne.s32.totalorder %s106, %s107
    %p121 = scmp.eq.s32.totalorder %s15, 1
    %p122 = por %p120, %p121
    %p124 = scmp.ne.s32.totalorder %s107, %s123
    %p125 = scmp.eq.s32.totalorder %s15, 0
    %p126 = por %p124, %p125
    %p127 = scmp.le.s32.totalorder 1, %s9
    %p128 = scmp.lt.s32.totalorder %s9, 3
    %p129 = pnand %p127, %p128
    %p130 = pneg %p129
    // Predicated region
    $region9: #{att_fire_module.3} parent=5 // pred_check
      _
    $region10: #{att_fire_module.3} parent=5 // pred_check_branch
      %132 = sbr.rel (%p129) target = $region12
    $region11: #{att_fire_module.3} parent=5 // pred_region
      %s133 = ssub.s32 %s9, 1
      // Predicated region
      $region13: #{att_fire_module.3} parent=11 // pred_check
        %p134 = pneg %p70
      $region14: #{att_fire_module.3} parent=11 // pred_check_branch
        %136 = sbr.rel (%p134) target = $region16
      $region15: #{att_fire_module.3} parent=11 // pred_region
        _
      $region16: #{att_fire_module.3} parent=11 // pred_fallthru
        _
      // Predicated region
      $region17: #{att_fire_module.3} parent=11 // pred_check
        %p137 = pneg %p91
      $region18: #{att_fire_module.3} parent=11 // pred_check_branch
        %139 = sbr.rel (%p137) target = $region20
      $region19: #{att_fire_module.3} parent=11 // pred_region
        _
      $region20: #{att_fire_module.3} parent=11 // pred_fallthru
        _
    $region12: #{att_fire_module.3} parent=5 // pred_fallthru
      _
    %p140 = scmp.lt.s32.totalorder %s9, 2
    // Predicated region
    $region21: #{att_fire_module.3} parent=5 // pred_check
      %p141 = pneg %p140
    $region22: #{att_fire_module.3} parent=5 // pred_check_branch
      %143 = sbr.rel (%p141) target = $region24
    $region23: #{att_fire_module.3} parent=5 // pred_region
      // Predicated region
      $region25: #{att_fire_module.3} parent=23 // pred_check
        %p144 = pneg %p43
      $region26: #{att_fire_module.3} parent=23 // pred_check_branch
        %146 = sbr.rel (%p144) target = $region28
      $region27: #{att_fire_module.3} parent=23 // pred_region
        %s147 = smul.u32 2, %s17
        %p148 = scmp.lt.s32.totalorder %s16, 1
        %s149 = scalar_select %p148, %s16, 1
        %p150 = scmp.lt.s32.totalorder %s147, 1
        %s151 = scalar_select %p150, %s147, 1
        %s152 = smul.addr %s149, 2
        %s153 = sadd.s32 %s151, %s152
        %s154 = smul.addr %s153, 4
        %s155 = scalar_lea.vmem %s0, %s154
        %s156 = smul.u32 2, %s17
      $region28: #{att_fire_module.3} parent=23 // pred_fallthru
        _
    $region24: #{att_fire_module.3} parent=5 // pred_fallthru
      _
    %p157 = scmp.le.s32.totalorder 1, %s9
    %p158 = scmp.lt.s32.totalorder %s9, 3
    %p159 = pnand %p157, %p158
    %p160 = pneg %p159
    // Predicated region
    $region29: #{att_fire_module.3} parent=5 // pred_check
      _
    $region30: #{att_fire_module.3} parent=5 // pred_check_branch
      %162 = sbr.rel (%p159) target = $region32
    $region31: #{att_fire_module.3} parent=5 // pred_region
      %s163 = ssub.s32 %s9, 1
      %s164 = smul.u32 2, %s19
      %p165 = scmp.lt.s32.totalorder %s18, 1
      %s166 = scalar_select %p165, %s18, 1
      %p167 = scmp.lt.s32.totalorder %s164, 1
      %s168 = scalar_select %p167, %s164, 1
      %s169 = smul.addr %s166, 2
      %s170 = sadd.s32 %s168, %s169
      %s171 = smul.addr %s170, 4
      %s172 = scalar_lea.vmem %s0, %s171
      %p173 = pneg %p49
      %p174 = pneg %p46
      %p175 = pneg %p70
      %p176 = pneg %p67
      %p177 = pneg %p91
      %p178 = pneg %p88
      %p179 = pneg %p119
      %p180 = pneg %p116
      %s181 = smul.u32 2, %s19
      %p182 = scmp.lt.s32.totalorder %s18, 1
      %s183 = scalar_select %p182, %s18, 1
      %p184 = scmp.lt.s32.totalorder %s181, 1
      %s185 = scalar_select %p184, %s181, 1
      %s186 = smul.addr %s183, 8
      %s187 = sadd.s32 %s185, %s186
      %s188 = smul.addr %s187, 8
      %s189 = scalar_lea.vmem %s3, %s188
      %s190 = smul.u32 2, %s19
      %p191 = scmp.lt.s32.totalorder %s18, 1
      %s192 = scalar_select %p191, %s18, 1
      %p193 = scmp.lt.s32.totalorder %s190, 1
      %s194 = scalar_select %p193, %s190, 1
      %s195 = smul.addr %s192, 2
      %s196 = sadd.s32 %s194, %s195
      %s197 = smul.addr %s196, 4
      %s198 = scalar_lea.vmem %s0, %s197
      %s199 = smul.u32 2, %s19
      %s200 = smul.u32 2, %s19
      %p201 = scmp.lt.s32.totalorder %s18, 1
      %s202 = scalar_select %p201, %s18, 1
      %p203 = scmp.lt.s32.totalorder %s200, 1
      %s204 = scalar_select %p203, %s200, 1
      %s205 = smul.addr %s202, 8
      %s206 = sadd.s32 %s204, %s205
      %s207 = smul.addr %s206, 8
      %s208 = scalar_lea.vmem %s3, %s207
      %s209 = smul.u32 2, %s19
      %v210 = vld [vmem:[%s1] sm:$0xff]
      %v211 = vld [vmem:[%s1 + $0x8] sm:$0xff]
      %v212 = vld [vmem:[%s1 + $0x10] sm:$0xff]
      %v213 = vld [vmem:[%s1 + $0x18] sm:$0xff]
      %v214 = vld [vmem:[%s198] sm:$0xff]
      %v215 = vld [vmem:[%s2] sm:$0xff]
      %v216 = vld [vmem:[%s2 + $0x8] sm:$0xff]
      %v217 = vld [vmem:[%s2 + $0x10] sm:$0xff]
      %v218 = vld [vmem:[%s2 + $0x18] sm:$0xff]
      %220 = vset.pattern.permute.xlu0 0
      %221 = vperm.xlu0 %220, %v215
      %v222 = vpop.permute.xlu0 %221
      %225 = vset.pattern.permute.xlu0 0
      %226 = vperm.xlu0 %225, %v216
      %v227 = vpop.permute.xlu0 %226
      %230 = vset.pattern.permute.xlu0 0
      %231 = vperm.xlu0 %230, %v217
      %v232 = vpop.permute.xlu0 %231
      %235 = vset.pattern.permute.xlu0 0
      %236 = vperm.xlu0 %235, %v218
      %v237 = vpop.permute.xlu0 %236
      %v240 = vcombine.high %v214, %v214
      %vm241 = vcmask 31744
      %v243 = vsel %vm241, %v210, 0
      %v246 = vsel %vm241, %v211, 0
      %v249 = vsel %vm241, %v212, 0
      %v252 = vsel %vm241, %v213, 0
      %vm254 = vcmask 1043456
      %v255 = vsel %vm254, %v214, 0
      %v257 = vsel %vm254, %v240, 0
      %259 = vmatprep.subr.mxu0 %v257
      %260 = vmatpush1.msra.mxu0 %v255
      %261 = vmatprep.subr.mxu0 0.0
      %262 = vmatpush1.msra.mxu0 0.0
      %263 = vmatprep.subr.mxu0 0.0
      %264 = vmatpush1.msra.mxu0 0.0
      %265 = vmatprep.subr.mxu0 0.0
      %266 = vmatpush1.msra.mxu0 0.0
      %267 = vmatprep.subr.mxu0 0.0
      %268 = vmatpush1.msra.mxu0 0.0
      %269 = vmatprep.subr.mxu0 0.0
      %270 = vmatpush1.msra.mxu0 0.0
      %271 = vmatprep.subr.mxu0 0.0
      %272 = vmatpush1.msra.mxu0 0.0
      %273 = vmatprep.subr.mxu0 0.0
      %274 = vmatpush1.msra.mxu0 0.0
      %275 = vmatprep.subr.mxu0 0.0
      %276 = vmatpush1.msra.mxu0 0.0
      %277 = vmatprep.subr.mxu0 0.0
      %278 = vmatpush1.msra.mxu0 0.0
      %279 = vmatprep.subr.mxu0 0.0
      %280 = vmatpush1.msra.mxu0 0.0
      %281 = vmatprep.subr.mxu0 0.0
      %282 = vmatpush1.msra.mxu0 0.0
      %283 = vmatprep.subr.mxu0 0.0
      %284 = vmatpush1.msra.mxu0 0.0
      %285 = vmatprep.subr.mxu0 0.0
      %286 = vmatpush1.msra.mxu0 0.0
      %287 = vmatprep.subr.mxu0 0.0
      %288 = vmatpush1.msra.mxu0 0.0
      %289 = vmatprep.subr.mxu0 0.0
      %290 = vmatpush1.msra.mxu0 0.0
      %291 = vmatprep.subr.mxu0 0.0
      %292 = vmatpush1.msra.mxu0 0.0
      %293 = vmatprep.subr.mxu0 0.0
      %294 = vmatpush1.msra.mxu0 0.0
      %295 = vmatprep.subr.mxu0 0.0
      %296 = vmatpush1.msra.mxu0 0.0
      %297 = vmatprep.subr.mxu0 0.0
      %298 = vmatpush1.msra.mxu0 0.0
      %299 = vmatprep.subr.mxu0 0.0
      %300 = vmatpush1.msra.mxu0 0.0
      %301 = vmatprep.subr.mxu0 0.0
      %302 = vmatpush1.msra.mxu0 0.0
      %303 = vmatprep.subr.mxu0 0.0
      %304 = vmatpush1.msra.mxu0 0.0
      %305 = vmatprep.subr.mxu0 0.0
      %306 = vmatpush1.msra.mxu0 0.0
      %307 = vmatprep.subr.mxu0 0.0
      %308 = vmatpush1.msra.mxu0 0.0
      %309 = vmatprep.subr.mxu0 0.0
      %310 = vmatpush1.msra.mxu0 0.0
      %311 = vmatprep.subr.mxu0 0.0
      %312 = vmatpush1.msra.mxu0 0.0
      %313 = vmatprep.subr.mxu0 0.0
      %314 = vmatpush1.msra.mxu0 0.0
      %315 = vmatprep.subr.mxu0 0.0
      %316 = vmatpush1.msra.mxu0 0.0
      %317 = vmatprep.subr.mxu0 0.0
      %318 = vmatpush1.msra.mxu0 0.0
      %319 = vmatprep.subr.mxu0 0.0
      %320 = vmatpush1.msra.mxu0 0.0
      %321 = vmatprep.subr.mxu0 0.0
      %322 = vmatpush1.msra.mxu0 0.0
      %323 = vmatprep.mubr.f32.mxu0 0.0
      %324 = vmatmul.mubr.f32.gmra.mrb[0].mxu0 %v243
      %v325 = vpop.f32.mrb[0].mxu0
      %v326 = vadd.f32 %v222, %v325
      %v327 = vpop.f32.mrb[0].mxu0
      %v328 = vadd.f32 %v222, %v327
      %329 = vmatprep.mubr.f32.mxu0 0.0
      %330 = vmatmul.mubr.f32.gmra.mrb[0].mxu0 %v246
      %v331 = vpop.f32.mrb[0].mxu0
      %v332 = vadd.f32 %v227, %v331
      %v333 = vpop.f32.mrb[0].mxu0
      %v334 = vadd.f32 %v227, %v333
      %335 = vmatprep.mubr.f32.mxu0 0.0
      %336 = vmatmul.mubr.f32.gmra.mrb[0].mxu0 %v249
      %v337 = vpop.f32.mrb[0].mxu0
      %v338 = vadd.f32 %v232, %v337
      %v339 = vpop.f32.mrb[0].mxu0
      %v340 = vadd.f32 %v232, %v339
      %341 = vmatprep.mubr.f32.mxu0 0.0
      %342 = vmatmul.mubr.f32.gmra.mrb[0].mxu0 %v252
      %v343 = vpop.f32.mrb[0].mxu0
      %v344 = vadd.f32 %v237, %v343
      %v345 = vpop.f32.mrb[0].mxu0
      %v346 = vadd.f32 %v237, %v345
      %347 = vdwg.mxu0
      %348 = vst [vmem:[%s208] sm:$0xff] %v326
      %349 = vst [vmem:[%s208 + $0x8] sm:$0xff] %v328
      %350 = vst [vmem:[%s208 + $0x10] sm:$0xff] %v332
      %351 = vst [vmem:[%s208 + $0x18] sm:$0xff] %v334
      %352 = vst [vmem:[%s208 + $0x20] sm:$0xff] %v338
      %353 = vst [vmem:[%s208 + $0x28] sm:$0xff] %v340
      %354 = vst [vmem:[%s208 + $0x30] sm:$0xff] %v344
      %355 = vst [vmem:[%s208 + $0x38] sm:$0xff] %v346
      %s356 = smul.u32 2, %s19
      %p357 = scmp.lt.s32.totalorder %s18, 1
      %s358 = scalar_select %p357, %s18, 1
      %p359 = scmp.lt.s32.totalorder %s356, 1
      %s360 = scalar_select %p359, %s356, 1
      %s361 = smul.addr %s358, 8
      %s362 = sadd.s32 %s360, %s361
      %s363 = smul.addr %s362, 8
      %s364 = scalar_lea.vmem %s3, %s363
      // Predicated region
      $region33: #{att_fire_module.3} parent=31 // pred_check
        %p365 = pneg %p116
      $region34: #{att_fire_module.3} parent=31 // pred_check_branch
        %367 = sbr.rel (%p365) target = $region36
      $region35: #{att_fire_module.3} parent=31 // pred_region
        %s368 = smul.u32 2, %s19
      $region36: #{att_fire_module.3} parent=31 // pred_fallthru
        _
    $region32: #{att_fire_module.3} parent=5 // pred_fallthru
      _
    %p369 = scmp.le.s32.totalorder 2, %s9
    // Predicated region
    $region37: #{att_fire_module.3} parent=5 // pred_check
      %p370 = pneg %p369
    $region38: #{att_fire_module.3} parent=5 // pred_check_branch
      %372 = sbr.rel (%p370) target = $region40
    $region39: #{att_fire_module.3} parent=5 // pred_region
      %s373 = ssub.s32 %s9, 2
      // Predicated region
      $region41: #{att_fire_module.3} parent=39 // pred_check
        %p374 = pneg %p122
      $region42: #{att_fire_module.3} parent=39 // pred_check_branch
        %376 = sbr.rel (%p374) target = $region44
      $region43: #{att_fire_module.3} parent=39 // pred_region
        %s377 = smul.u32 2, %s21
        %p378 = scmp.lt.s32.totalorder %s20, 1
        %s379 = scalar_select %p378, %s20, 1
        %p380 = scmp.lt.s32.totalorder %s377, 1
        %s381 = scalar_select %p380, %s377, 1
        %s382 = smul.addr %s379, 8
        %s383 = sadd.s32 %s381, %s382
        %s384 = smul.addr %s383, 8
        %s385 = scalar_lea.vmem %s3, %s384
      $region44: #{att_fire_module.3} parent=39 // pred_fallthru
        _
    $region40: #{att_fire_module.3} parent=5 // pred_fallthru
      _
  $region6: #{att_fire_module.3} parent=0 // loop_footer
    %s13 = sadd.s32 1, %s9
  $region7: #{att_fire_module.3} parent=0 // loop_footer_branch
    %8 = sbr.rel target = $region3
  $region8: #{att_fire_module.3} parent=0 // loop_exit
    _

// kernel: att_fire_module.2
$region0: #{att_fire_module.2}
  #allocation0 [shape = 'u32[]', space=smem, size = 0x4, offset = 0x4, fixed_abs, tag = 'smem constant byte address 0x4 - core index']
  #allocation1 [shape = 'u32[144,128]{1,0:T(1,128)}', space=vmem, size = 0x12000, scoped, tag = 'internal scratch']
  %s0 = inlined_call_operand.vmem [shape: f32[2,4,256], index: 0, kind: input, shape index: {}]
  %s1 = inlined_call_operand.vmem [shape: f32[2,4,4], index: 1, kind: output, shape index: {0}]
  %s2 = inlined_call_operand.vmem [shape: f32[2,4,1], index: 2, kind: output, shape index: {1}]
  %3 = xla_tuple %s1, %s2
  %s4 = sld [smem:[#allocation0]]
  $region49: #{att_fire_module.2} parent=0
    _
  %s6 = ssub.s32 1, %s4
  %s7 = scalar_select 0, %s6, %s4
  loop: start=0, step=1, limit=4
  $region2: #{att_fire_module.2} parent=0 // loop_pre_header
    _
  $region3: #{att_fire_module.2} parent=0 // loop_header
    %s9 = sphi 0, %s13
    %p10 = scmp.ge.s32.totalorder %s9, 4
    %s16 = sphi 0, %s28
    %s17 = sphi 0, %s24
    %s18 = sphi 0, %s16
    %s19 = sphi 0, %s17
    %s20 = sphi 0, %s18
    %s21 = sphi 0, %s19
    %s33 = sphi 0, %s35
    %s36 = sphi 0, %s33
    %s37 = sphi 0, %s36
    %s53 = sphi 0, %s37
    %s59 = sphi 0, %s61
    %s62 = sphi 0, %s59
    %s63 = sphi 0, %s62
    %s79 = sphi 0, %s63
    %s85 = sphi 0, %s87
    %s88 = sphi 0, %s85
    %s89 = sphi 0, %s88
    %s105 = sphi 0, %s89
  $region4: #{att_fire_module.2} parent=0 // loop_header_branch
    %12 = sbr.rel (%p10) target = $region8
  $region5: #{att_fire_module.2} parent=0 // loop_body
    %s14 = ssub.s32 %s9, 1
    %s15 = ssub.s32 %s9, 2
    %s22 = sadd.s32 1, %s17
    %p23 = scmp.ge.s32.totalorder %s22, 1
    %s24 = scalar_select %p23, 0, %s22
    %s25 = sadd.s32 1, %s16
    %s26 = scalar_select %p23, %s25, %s16
    %p27 = scmp.ge.s32.totalorder %s26, 2
    %s28 = scalar_select %p27, 0, %s26
    %s29 = ssub.s32 %s16, %s28
    %s30 = ssub.s32 %s17, %s24
    %s31 = sor.u32 %s29, %s30
    %p32 = scmp.eq.s32.totalorder %s31, 0
    %s34 = sadd.s32 %s33, 1
    %s35 = scalar_select %p32, %s33, %s34
    %p38 = pneg %p32
    %p39 = scmp.eq.s32.totalorder %s9, 1
    %p40 = por %p38, %p39
    %p41 = scmp.ne.s32.totalorder %s33, %s36
    %p42 = scmp.eq.s32.totalorder %s9, 0
    %p43 = por %p41, %p42
    %p44 = scmp.ne.s32.totalorder %s33, %s36
    %p45 = scmp.eq.s32.totalorder %s14, 1
    %p46 = por %p44, %p45
    %p47 = scmp.ne.s32.totalorder %s36, %s37
    %p48 = scmp.eq.s32.totalorder %s14, 0
    %p49 = por %p47, %p48
    %p50 = scmp.ne.s32.totalorder %s36, %s37
    %p51 = scmp.eq.s32.totalorder %s15, 1
    %p52 = por %p50, %p51
    %p54 = scmp.ne.s32.totalorder %s37, %s53
    %p55 = scmp.eq.s32.totalorder %s15, 0
    %p56 = por %p54, %p55
    %s57 = ssub.s32 %s16, %s28
    %p58 = scmp.eq.s32.totalorder %s57, 0
    %s60 = sadd.s32 %s59, 1
    %s61 = scalar_select %p58, %s59, %s60
    %p64 = pneg %p58
    %p65 = scmp.eq.s32.totalorder %s9, 1
    %p66 = por %p64, %p65
    %p67 = scmp.ne.s32.totalorder %s59, %s62
    %p68 = scmp.eq.s32.totalorder %s9, 0
    %p69 = por %p67, %p68
    %p70 = scmp.ne.s32.totalorder %s59, %s62
    %p71 = scmp.eq.s32.totalorder %s14, 1
    %p72 = por %p70, %p71
    %p73 = scmp.ne.s32.totalorder %s62, %s63
    %p74 = scmp.eq.s32.totalorder %s14, 0
    %p75 = por %p73, %p74
    %p76 = scmp.ne.s32.totalorder %s62, %s63
    %p77 = scmp.eq.s32.totalorder %s15, 1
    %p78 = por %p76, %p77
    %p80 = scmp.ne.s32.totalorder %s63, %s79
    %p81 = scmp.eq.s32.totalorder %s15, 0
    %p82 = por %p80, %p81
    %s83 = ssub.s32 %s16, %s28
    %p84 = scmp.eq.s32.totalorder %s83, 0
    %s86 = sadd.s32 %s85, 1
    %s87 = scalar_select %p84, %s85, %s86
    %p90 = pneg %p84
    %p91 = scmp.eq.s32.totalorder %s9, 1
    %p92 = por %p90, %p91
    %p93 = scmp.ne.s32.totalorder %s85, %s88
    %p94 = scmp.eq.s32.totalorder %s9, 0
    %p95 = por %p93, %p94
    %p96 = scmp.ne.s32.totalorder %s85, %s88
    %p97 = scmp.eq.s32.totalorder %s14, 1
    %p98 = por %p96, %p97
    %p99 = scmp.ne.s32.totalorder %s88, %s89
    %p100 = scmp.eq.s32.totalorder %s14, 0
    %p101 = por %p99, %p100
    %p102 = scmp.ne.s32.totalorder %s88, %s89
    %p103 = scmp.eq.s32.totalorder %s15, 1
    %p104 = por %p102, %p103
    %p106 = scmp.ne.s32.totalorder %s89, %s105
    %p107 = scmp.eq.s32.totalorder %s15, 0
    %p108 = por %p106, %p107
    %p109 = scmp.le.s32.totalorder 1, %s9
    %p110 = scmp.lt.s32.totalorder %s9, 3
    %p111 = pnand %p109, %p110
    %p112 = pneg %p111
    // Predicated region
    $region9: #{att_fire_module.2} parent=5 // pred_check
      _
    $region10: #{att_fire_module.2} parent=5 // pred_check_branch
      %114 = sbr.rel (%p111) target = $region12
    $region11: #{att_fire_module.2} parent=5 // pred_region
      %s115 = ssub.s32 %s9, 1
    $region12: #{att_fire_module.2} parent=5 // pred_fallthru
      _
    %p116 = scmp.lt.s32.totalorder %s9, 2
    // Predicated region
    $region13: #{att_fire_module.2} parent=5 // pred_check
      %p117 = pneg %p116
    $region14: #{att_fire_module.2} parent=5 // pred_check_branch
      %119 = sbr.rel (%p117) target = $region16
    $region15: #{att_fire_module.2} parent=5 // pred_region
      // Predicated region
      $region17: #{att_fire_module.2} parent=15 // pred_check
        %p120 = pneg %p43
      $region18: #{att_fire_module.2} parent=15 // pred_check_branch
        %122 = sbr.rel (%p120) target = $region20
      $region19: #{att_fire_module.2} parent=15 // pred_region
        %s123 = smul.u32 2, %s17
        %p124 = scmp.lt.s32.totalorder %s16, 1
        %s125 = scalar_select %p124, %s16, 1
        %p126 = scmp.lt.s32.totalorder %s123, 1
        %s127 = scalar_select %p126, %s123, 1
        %s128 = smul.addr %s125, 2
        %s129 = sadd.s32 %s127, %s128
        %s130 = smul.addr %s129, 4
        %s131 = scalar_lea.vmem %s0, %s130
        %s132 = smul.u32 2, %s17
      $region20: #{att_fire_module.2} parent=15 // pred_fallthru
        _
    $region16: #{att_fire_module.2} parent=5 // pred_fallthru
      _
    %p133 = scmp.le.s32.totalorder 1, %s9
    %p134 = scmp.lt.s32.totalorder %s9, 3
    %p135 = pnand %p133, %p134
    %p136 = pneg %p135
    // Predicated region
    $region21: #{att_fire_module.2} parent=5 // pred_check
      _
    $region22: #{att_fire_module.2} parent=5 // pred_check_branch
      %138 = sbr.rel (%p135) target = $region24
    $region23: #{att_fire_module.2} parent=5 // pred_region
      %s139 = ssub.s32 %s9, 1
      %s140 = smul.u32 2, %s19
      %p141 = scmp.lt.s32.totalorder %s18, 1
      %s142 = scalar_select %p141, %s18, 1
      %p143 = scmp.lt.s32.totalorder %s140, 1
      %s144 = scalar_select %p143, %s140, 1
      %s145 = smul.addr %s142, 2
      %s146 = sadd.s32 %s144, %s145
      %s147 = smul.addr %s146, 4
      %s148 = scalar_lea.vmem %s0, %s147
      %p149 = pneg %p49
      %p150 = pneg %p46
      %p151 = pneg %p75
      %p152 = pneg %p72
      %p153 = scmp.lt.s32.totalorder %s18, 1
      %s154 = scalar_select %p153, %s18, 1
      %s155 = smul.addr %s154, 4
      %s156 = scalar_lea.vmem %s1, %s155
      %p157 = pneg %p101
      %p158 = pneg %p98
      %p159 = scmp.lt.s32.totalorder %s18, 1
      %s160 = scalar_select %p159, %s18, 1
      %s161 = smul.addr %s160, 4
      %s162 = scalar_lea.vmem %s2, %s161
      %s163 = smul.u32 2, %s19
      %p164 = scmp.lt.s32.totalorder %s18, 1
      %s165 = scalar_select %p164, %s18, 1
      %p166 = scmp.lt.s32.totalorder %s163, 1
      %s167 = scalar_select %p166, %s163, 1
      %s168 = smul.addr %s165, 2
      %s169 = sadd.s32 %s167, %s168
      %s170 = smul.addr %s169, 4
      %s171 = scalar_lea.vmem %s0, %s170
      %s172 = smul.u32 2, %s19
      %p173 = scmp.lt.s32.totalorder %s18, 1
      %s174 = scalar_select %p173, %s18, 1
      %s175 = smul.addr %s174, 4
      %s176 = scalar_lea.vmem %s1, %s175
      %p177 = scmp.lt.s32.totalorder %s18, 1
      %s178 = scalar_select %p177, %s18, 1
      %s179 = smul.addr %s178, 4
      %s180 = scalar_lea.vmem %s2, %s179
      %p181 = scmp.eq.s32.totalorder %s19, 0
      // Predicated region
      $region25: #{att_fire_module.2} parent=23 // pred_check
        %p182 = pneg %p181
      $region26: #{att_fire_module.2} parent=23 // pred_check_branch
        %184 = sbr.rel (%p182) target = $region28
      $region27: #{att_fire_module.2} parent=23 // pred_region
        %vm185 = vcmask 27648
        %186 = vst.msk [vmem:[%s176] sm:$0xf] %vm185, 0.0
        %vm187 = vcmask 3072
        %188 = vst.msk [vmem:[%s180] sm:$0xf] %vm187, 0.0
      $region28: #{att_fire_module.2} parent=23 // pred_fallthru
        _
      %v189 = vld [vmem:[%s171] sm:$0xff]
      %v190 = vld [vmem:[%s176] sm:$0xf]
      %v192 = vcombine.high %v189, %v189
      %194 = vmatprep.subr.mxu0 %v192
      %195 = vmatpush1.xpose.msra.mxu0 %v189
      %196 = vmatprep.subr.mxu0 0.0
      %197 = vmatpush1.xpose.msra.mxu0 0.0
      %198 = vmatprep.subr.mxu0 0.0
      %199 = vmatpush1.xpose.msra.mxu0 0.0
      %200 = vmatprep.subr.mxu0 0.0
      %201 = vmatpush1.xpose.msra.mxu0 0.0
      %202 = vmatprep.subr.mxu0 0.0
      %203 = vmatpush1.xpose.msra.mxu0 0.0
      %204 = vmatprep.subr.mxu0 0.0
      %205 = vmatpush1.xpose.msra.mxu0 0.0
      %206 = vmatprep.subr.mxu0 0.0
      %207 = vmatpush1.xpose.msra.mxu0 0.0
      %208 = vmatprep.subr.mxu0 0.0
      %209 = vmatpush1.xpose.msra.mxu0 0.0
      %210 = vmatprep.subr.mxu0 0.0
      %211 = vmatpush1.xpose.msra.mxu0 0.0
      %212 = vmatprep.subr.mxu0 0.0
      %213 = vmatpush1.xpose.msra.mxu0 0.0
      %214 = vmatprep.subr.mxu0 0.0
      %215 = vmatpush1.xpose.msra.mxu0 0.0
      %216 = vmatprep.subr.mxu0 0.0
      %217 = vmatpush1.xpose.msra.mxu0 0.0
      %218 = vmatprep.subr.mxu0 0.0
      %219 = vmatpush1.xpose.msra.mxu0 0.0
      %220 = vmatprep.subr.mxu0 0.0
      %221 = vmatpush1.xpose.msra.mxu0 0.0
      %222 = vmatprep.subr.mxu0 0.0
      %223 = vmatpush1.xpose.msra.mxu0 0.0
      %224 = vmatprep.subr.mxu0 0.0
      %225 = vmatpush1.xpose.msra.mxu0 0.0
      %226 = vmatprep.subr.mxu0 0.0
      %227 = vmatpush1.xpose.msra.mxu0 0.0
      %228 = vmatprep.subr.mxu0 0.0
      %229 = vmatpush1.xpose.msra.mxu0 0.0
      %230 = vmatprep.subr.mxu0 0.0
      %231 = vmatpush1.xpose.msra.mxu0 0.0
      %232 = vmatprep.subr.mxu0 0.0
      %233 = vmatpush1.xpose.msra.mxu0 0.0
      %234 = vmatprep.subr.mxu0 0.0
      %235 = vmatpush1.xpose.msra.mxu0 0.0
      %236 = vmatprep.subr.mxu0 0.0
      %237 = vmatpush1.xpose.msra.mxu0 0.0
      %238 = vmatprep.subr.mxu0 0.0
      %239 = vmatpush1.xpose.msra.mxu0 0.0
      %240 = vmatprep.subr.mxu0 0.0
      %241 = vmatpush1.xpose.msra.mxu0 0.0
      %242 = vmatprep.subr.mxu0 0.0
      %243 = vmatpush1.xpose.msra.mxu0 0.0
      %244 = vmatprep.subr.mxu0 0.0
      %245 = vmatpush1.xpose.msra.mxu0 0.0
      %246 = vmatprep.subr.mxu0 0.0
      %247 = vmatpush1.xpose.msra.mxu0 0.0
      %248 = vmatprep.subr.mxu0 0.0
      %249 = vmatpush1.xpose.msra.mxu0 0.0
      %250 = vmatprep.subr.mxu0 0.0
      %251 = vmatpush1.xpose.msra.mxu0 0.0
      %252 = vmatprep.subr.mxu0 0.0
      %253 = vmatpush1.xpose.msra.mxu0 0.0
      %254 = vmatprep.subr.mxu0 0.0
      %255 = vmatpush1.xpose.msra.mxu0 0.0
      %256 = vmatprep.subr.mxu0 0.0
      %257 = vmatpush1.xpose.msra.mxu0 0.0
      %258 = vmatprep.mubr.f32.mxu0 %v192
      %259 = vmatmul.mubr.f32.gmra.mrb[0].mxu0 %v189
      %v260 = vpop.f32.mrb[0].mxu0
      %v261 = vadd.f32 0.0, %v260
      %v262 = vpop.f32.mrb[0].mxu0
      %263 = vdwg.mxu0
      %v264 = vadd.f32 %v190, %v261
      %vm265 = vcmask 27648
      %266 = vst.msk [vmem:[%s176] sm:$0xf] %vm265, %v264
      %v267 = vld [vmem:[%s180] sm:$0xf]
      %vm268 = vcmask 1043456
      %v269 = vsel %vm268, %v189, 0.0
      %v270 = vsel %vm268, %v192, 0.0
      %v271 = vadd.f32 %v269, %v270
      %272 = vadd.xlane.f32.xlu0 %v271
      %v273 = vpop.xlane.xlu0 %272
      %v274 = vadd.f32 %v267, %v273
      %vm275 = vcmask 3072
      %276 = vst.msk [vmem:[%s180] sm:$0xf] %vm275, %v274
      %p277 = scmp.lt.s32.totalorder %s18, 1
      %s278 = scalar_select %p277, %s18, 1
      %s279 = smul.addr %s278, 4
      %s280 = scalar_lea.vmem %s1, %s279
      %p281 = scmp.lt.s32.totalorder %s18, 1
      %s282 = scalar_select %p281, %s18, 1
      %s283 = smul.addr %s282, 4
      %s284 = scalar_lea.vmem %s2, %s283
      // Predicated region
      $region29: #{att_fire_module.2} parent=23 // pred_check
        %p285 = pneg %p72
      $region30: #{att_fire_module.2} parent=23 // pred_check_branch
        %287 = sbr.rel (%p285) target = $region32
      $region31: #{att_fire_module.2} parent=23 // pred_region
        _
      $region32: #{att_fire_module.2} parent=23 // pred_fallthru
        _
      // Predicated region
      $region33: #{att_fire_module.2} parent=23 // pred_check
        %p288 = pneg %p98
      $region34: #{att_fire_module.2} parent=23 // pred_check_branch
        %290 = sbr.rel (%p288) target = $region36
      $region35: #{att_fire_module.2} parent=23 // pred_region
        _
      $region36: #{att_fire_module.2} parent=23 // pred_fallthru
        _
    $region24: #{att_fire_module.2} parent=5 // pred_fallthru
      _
    %p291 = scmp.le.s32.totalorder 2, %s9
    // Predicated region
    $region37: #{att_fire_module.2} parent=5 // pred_check
      %p292 = pneg %p291
    $region38: #{att_fire_module.2} parent=5 // pred_check_branch
      %294 = sbr.rel (%p292) target = $region40
    $region39: #{att_fire_module.2} parent=5 // pred_region
      %s295 = ssub.s32 %s9, 2
      // Predicated region
      $region41: #{att_fire_module.2} parent=39 // pred_check
        %p296 = pneg %p78
      $region42: #{att_fire_module.2} parent=39 // pred_check_branch
        %298 = sbr.rel (%p296) target = $region44
      $region43: #{att_fire_module.2} parent=39 // pred_region
        %p299 = scmp.lt.s32.totalorder %s20, 1
        %s300 = scalar_select %p299, %s20, 1
        %s301 = smul.addr %s300, 4
        %s302 = scalar_lea.vmem %s1, %s301
      $region44: #{att_fire_module.2} parent=39 // pred_fallthru
        _
      // Predicated region
      $region45: #{att_fire_module.2} parent=39 // pred_check
        %p303 = pneg %p104
      $region46: #{att_fire_module.2} parent=39 // pred_check_branch
        %305 = sbr.rel (%p303) target = $region48
      $region47: #{att_fire_module.2} parent=39 // pred_region
        %p306 = scmp.lt.s32.totalorder %s20, 1
        %s307 = scalar_select %p306, %s20, 1
        %s308 = smul.addr %s307, 4
        %s309 = scalar_lea.vmem %s2, %s308
      $region48: #{att_fire_module.2} parent=39 // pred_fallthru
        _
    $region40: #{att_fire_module.2} parent=5 // pred_fallthru
      _
  $region6: #{att_fire_module.2} parent=0 // loop_footer
    %s13 = sadd.s32 1, %s9
  $region7: #{att_fire_module.2} parent=0 // loop_footer_branch
    %8 = sbr.rel target = $region3
  $region8: #{att_fire_module.2} parent=0 // loop_exit
    _

</llo_original>
